<compile_context>
chip_gen: v7x
topology: tpu7x:2x2x1
jax: 0.10.0
libtpu: 0.0.40
codegen_flags: <defaults>
</compile_context>

<pallas_src>
import functools

import jax
import jax.numpy as jnp
from jax.experimental import pallas as pl
from jax.experimental.pallas import tpu as pltpu


_VMEM_SPEC = pl.BlockSpec(memory_space=pltpu.MemorySpace.VMEM)
_SMEM_SPEC = pl.BlockSpec(memory_space=pltpu.MemorySpace.SMEM)

_IN = 5      # fc1 in_features
_HID = 4     # fc1 out / fc2 in
_OUT = 3     # fc2 out_features (num classes)


# ----------------------------------------------------------------------------
# Shared in-kernel forward math: one fused affine  logits = x @ Wf + bf
# ----------------------------------------------------------------------------
def _fused_affine(x_ref, p_ref):
    """x: (B, 5); packed params p: (8, 128) with Wf in [0:5, 0:3], bf in [5, 0:3].

    The K=5 contraction is unrolled on the VPU (sum_k x[:,k:k+1] * Wf[k:k+1,:]);
    at this size the MXU round trip (push + MRF pop) is pure serial latency.
    """
    x = x_ref[...].astype(jnp.float32)                   # (B, 5)
    acc = x[:, 0:1] * p_ref[0:1, 0:_OUT] + p_ref[_IN:_IN + 1, 0:_OUT]
    for k in range(1, _IN):                              # static -> fully unrolled
        acc = acc + x[:, k:k + 1] * p_ref[k:k + 1, 0:_OUT]
    return acc                                           # (B, 3) f32


# ----------------------------------------------------------------------------
# Kernels
# ----------------------------------------------------------------------------
def _mlp_logits_kernel(x_ref, p_ref, logits_ref):
    logits_ref[...] = _fused_affine(x_ref, p_ref).astype(logits_ref.dtype)


def _mlp_ce_kernel(x_ref, p_ref, t_ref, logits_ref, loss_ref):
    logits = _fused_affine(x_ref, p_ref)                 # (B, 3)
    logits_ref[...] = logits.astype(logits_ref.dtype)

    # cross_entropy(logits, t) == mean_i( lse_i - z[i, t_i] ), z = logits - max
    m = jnp.max(logits, axis=-1, keepdims=True)
    z = logits - m
    lse = jnp.log(jnp.sum(jnp.exp(z), axis=-1, keepdims=True))   # (B, 1)

    tgt = t_ref[...]                                             # (B, 1) int32
    classes = jax.lax.broadcasted_iota(jnp.int32, z.shape, 1)
    onehot = (classes == tgt).astype(jnp.float32)                # (B, C)

    inv_b = 1.0 / z.shape[0]                                     # static constant
    # Scalar store into SMEM (single sst) instead of a padded VMEM tile.
    loss_ref[0] = (jnp.sum(lse) - jnp.sum(onehot * z)) * inv_b


# ----------------------------------------------------------------------------
# Parameter init (deterministic, PyTorch nn.Linear-style uniform bounds).
# Keeps the original per-layer tensors (for reference / interface) AND builds
# the kernel-native fused+packed operand once, so the per-call wrapper emits
# zero extra HLO around the pallas custom call.
# ----------------------------------------------------------------------------
def init_network_a_params(key):
    k1, k2, k3, k4 = jax.random.split(key, 4)
    bound1 = 1.0 / jnp.sqrt(float(_IN))    # fan_in = 5
    bound2 = 1.0 / jnp.sqrt(float(_HID))   # fan_in = 4
    fc1_w = jax.random.uniform(k1, (_HID, _IN), jnp.float32, -bound1, bound1)
    fc1_b = jax.random.uniform(k2, (_HID,), jnp.float32, -bound1, bound1)
    fc2_w = jax.random.uniform(k3, (_OUT, _HID), jnp.float32, -bound2, bound2)
    fc2_b = jax.random.uniform(k4, (_OUT,), jnp.float32, -bound2, bound2)

    fc1_wt = fc1_w.T                                   # (5, 4)
    fc2_wt = fc2_w.T                                   # (4, 3)

    # Algebraic fusion (valid because there is no activation between fc1/fc2):
    w_fused = fc1_wt @ fc2_wt                          # (5, 3)
    b_fused = fc1_b.reshape(1, _HID) @ fc2_wt + fc2_b.reshape(1, _OUT)  # (1, 3)

    # One (8,128)-aligned VMEM operand holding every parameter -> single DMA.
    packed = jnp.zeros((8, 128), jnp.float32)
    packed = packed.at[0:_IN, 0:_OUT].set(w_fused)
    packed = packed.at[_IN, 0:_OUT].set(b_fused.reshape(_OUT))

    return {
        # original layout, used only by the pure-JAX reference
        "fc1_wt": fc1_wt, "fc1_b": fc1_b.reshape(1, _HID),
        "fc2_wt": fc2_wt, "fc2_b": fc2_b.reshape(1, _OUT),
        # kernel-native operand
        "packed": packed,
    }


# ----------------------------------------------------------------------------
# Wrapper mirroring NetworkA.forward(inputs, targets=None, flip=False)
# ----------------------------------------------------------------------------
def _cost_estimate(batch, with_targets):
    flops = 2 * batch * _IN * _OUT + batch * _OUT             # fused affine + bias
    transcendentals = 4 * batch if with_targets else 0        # 3 exp + 1 log per row
    bytes_accessed = batch * _IN * 4 + 8 * 128 * 4 + batch * _OUT * 4
    if with_targets:
        flops += batch * (3 * _OUT + 4)                       # softmax/CE epilogue
        bytes_accessed += batch * 4 + 4
    return pl.CostEstimate(flops=flops, transcendentals=transcendentals,
                           bytes_accessed=bytes_accessed)


@functools.partial(jax.jit, static_argnames=("with_targets",))
def _forward_impl(params, inputs, targets, with_targets):
    B = inputs.shape[0]
    packed = params["packed"]

    if not with_targets:
        logits = pl.pallas_call(
            _mlp_logits_kernel,
            out_shape=jax.ShapeDtypeStruct((B, _OUT), jnp.float32),
            in_specs=[_VMEM_SPEC, _VMEM_SPEC],
            out_specs=_VMEM_SPEC,
            cost_estimate=_cost_estimate(B, False),
        )(inputs, packed)
        return logits

    t2d = targets.astype(jnp.int32).reshape(B, 1)
    logits, loss = pl.pallas_call(
        _mlp_ce_kernel,
        out_shape=(
            jax.ShapeDtypeStruct((B, _OUT), jnp.float32),
            jax.ShapeDtypeStruct((1,), jnp.float32),           # scalar loss in SMEM
        ),
        in_specs=[_VMEM_SPEC, _VMEM_SPEC, _VMEM_SPEC],
        out_specs=(_VMEM_SPEC, _SMEM_SPEC),
        cost_estimate=_cost_estimate(B, True),
    )(inputs, packed, t2d)
    return logits, loss[0]


def network_a_forward(params, inputs, targets=None, flip=False):
    """Pallas equivalent of NetworkA.forward."""
    if targets is None:
        return _forward_impl(params, inputs, None, False)
    logits, loss = _forward_impl(params, inputs, targets, True)
    if flip:
        return (loss, logits)
    return (logits, loss)


# ----------------------------------------------------------------------------
# Pure-JAX reference (unfused, original layer-by-layer math) for sanity check
# ----------------------------------------------------------------------------
def _reference(params, inputs, targets):
    h = inputs @ params["fc1_wt"] + params["fc1_b"]
    logits = h @ params["fc2_wt"] + params["fc2_b"]
    logp = jax.nn.log_softmax(logits, axis=-1)
    loss = -jnp.mean(jnp.take_along_axis(logp, targets[:, None], axis=1))
    return logits, loss


if __name__ == "__main__":
    key = jax.random.PRNGKey(0)
    k_param, k_x, k_t = jax.random.split(key, 3)

    params = init_network_a_params(k_param)
    batch = 8
    x = jax.random.normal(k_x, (batch, _IN), jnp.float32)
    targets = jax.random.randint(k_t, (batch,), 0, _OUT, jnp.int32)

    # Path 1: no targets -> logits only
    logits_only = network_a_forward(params, x)
    jax.block_until_ready(logits_only)

    # Path 2: with targets -> (logits, loss); flip=True -> (loss, logits)
    logits, loss = network_a_forward(params, x, targets)
    loss_f, logits_f = network_a_forward(params, x, targets, flip=True)
    jax.block_until_ready((logits, loss, loss_f, logits_f))

    ref_logits, ref_loss = _reference(params, x, targets)
    assert jnp.allclose(logits, ref_logits, atol=1e-5, rtol=1e-5)
    assert jnp.allclose(logits_only, ref_logits, atol=1e-5, rtol=1e-5)
    assert jnp.allclose(loss, ref_loss, atol=1e-5, rtol=1e-5)
    assert jnp.allclose(loss_f, ref_loss, atol=1e-5, rtol=1e-5)

    print("KERNEL_OK")
</pallas_src>

<mosaic_0001>
module attributes {stable_mosaic.version = 11 : i64} {
  func.func @_mlp_logits_kernel(%arg0: memref<8x5xf32, #tpu.memory_space<vmem>>, %arg1: memref<8x128xf32, #tpu.memory_space<vmem>>, %arg2: memref<8x3xf32, #tpu.memory_space<vmem>>) attributes {dimension_semantics = [], scalar_prefetch = 0 : i64, scratch_operands = 0 : i64, tpu.core_type = #tpu.core_type<tc>} {
    %c0 = arith.constant 0 : index
    %c0_0 = arith.constant 0 : index
    %0 = vector.load %arg0[%c0, %c0_0] : memref<8x5xf32, #tpu.memory_space<vmem>>, vector<8x5xf32>
    %1 = vector.extract_strided_slice %0 {offsets = [0, 0], sizes = [8, 1], strides = [1, 1]} : vector<8x5xf32> to vector<8x1xf32>
    %c0_1 = arith.constant 0 : index
    %c0_2 = arith.constant 0 : index
    %2 = vector.load %arg1[%c0_1, %c0_2] : memref<8x128xf32, #tpu.memory_space<vmem>>, vector<1x3xf32>
    %3 = vector.broadcast %1 : vector<8x1xf32> to vector<8x3xf32>
    %4 = vector.broadcast %2 : vector<1x3xf32> to vector<8x3xf32>
    %5 = arith.mulf %3, %4 : vector<8x3xf32>
    %c5 = arith.constant 5 : index
    %c0_3 = arith.constant 0 : index
    %6 = vector.load %arg1[%c5, %c0_3] : memref<8x128xf32, #tpu.memory_space<vmem>>, vector<1x3xf32>
    %7 = vector.broadcast %6 : vector<1x3xf32> to vector<8x3xf32>
    %8 = arith.addf %5, %7 : vector<8x3xf32>
    %9 = vector.extract_strided_slice %0 {offsets = [0, 1], sizes = [8, 1], strides = [1, 1]} : vector<8x5xf32> to vector<8x1xf32>
    %c1 = arith.constant 1 : index
    %c0_4 = arith.constant 0 : index
    %10 = vector.load %arg1[%c1, %c0_4] : memref<8x128xf32, #tpu.memory_space<vmem>>, vector<1x3xf32>
    %11 = vector.broadcast %9 : vector<8x1xf32> to vector<8x3xf32>
    %12 = vector.broadcast %10 : vector<1x3xf32> to vector<8x3xf32>
    %13 = arith.mulf %11, %12 : vector<8x3xf32>
    %14 = arith.addf %8, %13 : vector<8x3xf32>
    %15 = vector.extract_strided_slice %0 {offsets = [0, 2], sizes = [8, 1], strides = [1, 1]} : vector<8x5xf32> to vector<8x1xf32>
    %c2 = arith.constant 2 : index
    %c0_5 = arith.constant 0 : index
    %16 = vector.load %arg1[%c2, %c0_5] : memref<8x128xf32, #tpu.memory_space<vmem>>, vector<1x3xf32>
    %17 = vector.broadcast %15 : vector<8x1xf32> to vector<8x3xf32>
    %18 = vector.broadcast %16 : vector<1x3xf32> to vector<8x3xf32>
    %19 = arith.mulf %17, %18 : vector<8x3xf32>
    %20 = arith.addf %14, %19 : vector<8x3xf32>
    %21 = vector.extract_strided_slice %0 {offsets = [0, 3], sizes = [8, 1], strides = [1, 1]} : vector<8x5xf32> to vector<8x1xf32>
    %c3 = arith.constant 3 : index
    %c0_6 = arith.constant 0 : index
    %22 = vector.load %arg1[%c3, %c0_6] : memref<8x128xf32, #tpu.memory_space<vmem>>, vector<1x3xf32>
    %23 = vector.broadcast %21 : vector<8x1xf32> to vector<8x3xf32>
    %24 = vector.broadcast %22 : vector<1x3xf32> to vector<8x3xf32>
    %25 = arith.mulf %23, %24 : vector<8x3xf32>
    %26 = arith.addf %20, %25 : vector<8x3xf32>
    %27 = vector.extract_strided_slice %0 {offsets = [0, 4], sizes = [8, 1], strides = [1, 1]} : vector<8x5xf32> to vector<8x1xf32>
    %c4 = arith.constant 4 : index
    %c0_7 = arith.constant 0 : index
    %28 = vector.load %arg1[%c4, %c0_7] : memref<8x128xf32, #tpu.memory_space<vmem>>, vector<1x3xf32>
    %29 = vector.broadcast %27 : vector<8x1xf32> to vector<8x3xf32>
    %30 = vector.broadcast %28 : vector<1x3xf32> to vector<8x3xf32>
    %31 = arith.mulf %29, %30 : vector<8x3xf32>
    %32 = arith.addf %26, %31 : vector<8x3xf32>
    %c0_8 = arith.constant 0 : index
    %c0_9 = arith.constant 0 : index
    %33 = vector.load %arg2[%c0_8, %c0_9] : memref<8x3xf32, #tpu.memory_space<vmem>>, vector<8x3xf32>
    tpu.vector_store %arg2[%c0_8, %c0_9], %32 {strides = array<i32>} : memref<8x3xf32, #tpu.memory_space<vmem>>, vector<8x3xf32>,
    return
  }
}

</mosaic_0001>

<llo_original>
// kernel: _forward_impl.1
$region0: #{_forward_impl.1}
  #allocation0 [shape = 'u32[]', space=smem, size = 0x4, offset = 0x4, fixed_abs, tag = 'smem constant byte address 0x4 - core index']
  #allocation1 [shape = 'u32[144,128]{1,0:T(1,128)}', space=vmem, size = 0x12000, scoped, tag = 'internal scratch']
  %s0 = inlined_call_operand.hbm [shape: f32[8,5], index: 0, kind: input, shape index: {}]
  %s1 = inlined_call_operand.hbm [shape: f32[8,128], index: 1, kind: input, shape index: {}]
  %s2 = inlined_call_operand.vmem [shape: f32[8,3], index: 2, kind: output, shape index: {}]
  %s3 = sld [smem:[#allocation0]]
  $region26: #{_forward_impl.1} parent=0
    _
  %s5 = ssub.s32 1, %s3
  %s6 = scalar_select 0, %s5, %s3
  $region1: #{_forward_impl.1} parent=0
    #allocation2 [shape = 'u8[4096]{0}', space=vmem, size = 0x1000, scoped, tag = 'input window, operand 0, single buffered']
    #allocation3 [shape = 's32[1]{0}', space=sflag, size = 0x4, scoped, tag = 'scoped memory for _forward_impl.1']
    #allocation4 [shape = 'u8[4096]{0}', space=vmem, size = 0x1000, scoped, tag = 'input window, operand 1, single buffered']
    #allocation5 [shape = 's32[1]{0}', space=sflag, size = 0x4, scoped, tag = 'scoped memory for _forward_impl.1']
    %7 = vsyncpa [#allocation3], 0
    %8 = vsyncpa [#allocation5], 0
    // Predicated region
    $region2: #{_forward_impl.1} parent=1 // pred_check
      _
    $region3: #{_forward_impl.1} parent=1 // pred_check_branch
      %10 = sbr.rel (0) target = $region5
    $region4: #{_forward_impl.1} parent=1 // pred_region
      %s12 = ssub.s32 128, 128
      %13 = vsyncadd [#allocation3], %s12
      %s15 = sshll.u32 [#allocation2], 4
      %s16 = int_to_ptr.vmem [resolvable:$true] %s15
      %18 = dma.hbm_to_vmem [thread:$0]  %s0, 128, %s16, [#allocation3]
    $region5: #{_forward_impl.1} parent=1 // pred_fallthru
      _
    // Predicated region
    $region6: #{_forward_impl.1} parent=1 // pred_check
      _
    $region7: #{_forward_impl.1} parent=1 // pred_check_branch
      %20 = sbr.rel (0) target = $region9
    $region8: #{_forward_impl.1} parent=1 // pred_region
      %s22 = ssub.s32 128, 128
      %23 = vsyncadd [#allocation5], %s22
      %s25 = sshll.u32 [#allocation4], 4
      %s26 = int_to_ptr.vmem [resolvable:$true] %s25
      %28 = dma.hbm_to_vmem [thread:$0]  %s1, 128, %s26, [#allocation5]
    $region9: #{_forward_impl.1} parent=1 // pred_fallthru
      _
    // Predicated region
    $region10: #{_forward_impl.1} parent=1 // pred_check
      _
    $region11: #{_forward_impl.1} parent=1 // pred_check_branch
      %30 = sbr.rel (0) target = $region13
    $region12: #{_forward_impl.1} parent=1 // pred_region
      %31 = dma.done [#allocation3], 128
    $region13: #{_forward_impl.1} parent=1 // pred_fallthru
      _
    // Predicated region
    $region14: #{_forward_impl.1} parent=1 // pred_check
      _
    $region15: #{_forward_impl.1} parent=1 // pred_check_branch
      %33 = sbr.rel (0) target = $region17
    $region16: #{_forward_impl.1} parent=1 // pred_region
      %34 = dma.done [#allocation5], 128
    $region17: #{_forward_impl.1} parent=1 // pred_fallthru
      _
    %v35 = vld [vmem:[#allocation2] sm:$0xff]
    %v36 = vld [vmem:[#allocation4] sm:$0x1]
    %38 = vset.pattern.permute.xlu0 0
    %39 = vperm.xlu0 %38, %v35
    %v40 = vpop.permute.xlu0 %39
    %v42 = vlaneseq
    %v43 = vshrl.u32 %v42, 7
    %v44 = vsub.s32 0, %v43
    %v45 = vrot.slane %v36, %v44
    %v46 = vmul.f32 %v40, %v45
    %v47 = vld [vmem:[#allocation4 + $0x5] sm:$0x1]
    %v48 = vlaneseq
    %v49 = vshrl.u32 %v48, 7
    %v50 = vsub.s32 0, %v49
    %v51 = vrot.slane %v47, %v50
    %v52 = vadd.f32 %v46, %v51
    %v53 = vld [vmem:[#allocation4 + $0x1] sm:$0x1]
    %54 = vset.pattern.permute.xlu0 1
    %55 = vperm.xlu0 %54, %v35
    %v56 = vpop.permute.xlu0 %55
    %v58 = vlaneseq
    %v59 = vshrl.u32 %v58, 7
    %v60 = vsub.s32 0, %v59
    %v61 = vrot.slane %v53, %v60
    %v62 = vmul.f32 %v56, %v61
    %v63 = vadd.f32 %v52, %v62
    %v64 = vld [vmem:[#allocation4 + $0x2] sm:$0x1]
    %65 = vset.pattern.permute.xlu0 2
    %66 = vperm.xlu0 %65, %v35
    %v67 = vpop.permute.xlu0 %66
    %v69 = vlaneseq
    %v70 = vshrl.u32 %v69, 7
    %v71 = vsub.s32 0, %v70
    %v72 = vrot.slane %v64, %v71
    %v73 = vmul.f32 %v67, %v72
    %v74 = vadd.f32 %v63, %v73
    %v75 = vld [vmem:[#allocation4 + $0x3] sm:$0x1]
    %76 = vset.pattern.permute.xlu0 3
    %77 = vperm.xlu0 %76, %v35
    %v78 = vpop.permute.xlu0 %77
    %v80 = vlaneseq
    %v81 = vshrl.u32 %v80, 7
    %v82 = vsub.s32 0, %v81
    %v83 = vrot.slane %v75, %v82
    %v84 = vmul.f32 %v78, %v83
    %v85 = vadd.f32 %v74, %v84
    %v86 = vld [vmem:[#allocation4 + $0x4] sm:$0x1]
    %87 = vset.pattern.permute.xlu0 4
    %88 = vperm.xlu0 %87, %v35
    %v89 = vpop.permute.xlu0 %88
    %v91 = vlaneseq
    %v92 = vshrl.u32 %v91, 7
    %v93 = vsub.s32 0, %v92
    %v94 = vrot.slane %v86, %v93
    %v95 = vmul.f32 %v89, %v94
    %v96 = vadd.f32 %v85, %v95
    %vm97 = vcmask 23552
    %98 = vst.msk [vmem:[%s2] sm:$0xff] %vm97, %v96
    // Predicated region
    $region18: #{_forward_impl.1} parent=1 // pred_check
      _
    $region19: #{_forward_impl.1} parent=1 // pred_check_branch
      %100 = sbr.rel (0) target = $region21
    $region20: #{_forward_impl.1} parent=1 // pred_region
      _
    $region21: #{_forward_impl.1} parent=1 // pred_fallthru
      _
    // Predicated region
    $region22: #{_forward_impl.1} parent=1 // pred_check
      _
    $region23: #{_forward_impl.1} parent=1 // pred_check_branch
      %102 = sbr.rel (0) target = $region25
    $region24: #{_forward_impl.1} parent=1 // pred_region
      _
    $region25: #{_forward_impl.1} parent=1 // pred_fallthru
      _
    %103 = vsyncpa [#allocation3], 1
    %104 = vsyncpa [#allocation5], 1

</llo_original>
